<compile_context>
chip_gen: v7x
topology: tpu7x:2x2x1
jax: 0.10.0
libtpu: 0.0.40
codegen_flags: <defaults>
</compile_context>

<pallas_src>
import functools

import jax
import jax.numpy as jnp
from jax import lax
from jax.experimental import pallas as pl
from jax.experimental.pallas import tpu as pltpu

THRESH = 0.9


# ---------------------------------------------------------------------------
# Kernels
# ---------------------------------------------------------------------------
def _maxmin_3d_kernel(f_ref, p_ref, o_ref, *, inv_d, thresh):
    # f_ref: (Bb, M, D) block; p_ref: (K, D); o_ref: (Bb, K) block.
    bb, m, d = f_ref.shape
    k = p_ref.shape[0]

    feat = f_ref[...].astype(jnp.float32).reshape(bb * m, d)   # (Bb*M, D)
    proto = p_ref[...].astype(jnp.float32)                     # (K, D)

    # scores[(b,m), k] = <feat_bm, proto_k> * (1/D)  -- last-dim contraction,
    # no transpose of the prototype tile.
    scores = lax.dot_general(
        feat, proto,
        dimension_numbers=(((1,), (1,)), ((), ())),
        preferred_element_type=jnp.float32,
    ) * inv_d
    scores = scores.reshape(bb, m, k)                          # (Bb, M, K)

    # Softmax pooling over M without materializing w = e / sum(e):
    #   sum_m scores * softmax(scores)_m == sum_m(scores*e) / sum_m(e)
    s_max = jnp.max(scores, axis=1, keepdims=True)             # (Bb, 1, K)
    e = jnp.exp(scores - s_max)                                # (Bb, M, K)
    num = jnp.sum(scores * e, axis=1)                          # (Bb, K)
    den = jnp.sum(e, axis=1)                                   # (Bb, K)
    pooled = num / den                                         # (Bb, K)

    # Max-min normalization over the prototype axis K.
    p_max = jnp.max(pooled, axis=-1, keepdims=True)
    p_min = jnp.min(pooled, axis=-1, keepdims=True)
    norm = (pooled - p_min) / (p_max - p_min)

    o_ref[...] = (norm > thresh).astype(o_ref.dtype)


def _maxmin_2d_kernel(f_ref, p_ref, o_ref, *, inv_d, thresh):
    # f_ref: (TN, D) block; p_ref: (K, D); o_ref: (TN, K) block.
    feat = f_ref[...].astype(jnp.float32)
    proto = p_ref[...].astype(jnp.float32)

    scores = lax.dot_general(
        feat, proto,
        dimension_numbers=(((1,), (1,)), ((), ())),
        preferred_element_type=jnp.float32,
    ) * inv_d                                                  # (TN, K)

    s_max = jnp.max(scores, axis=-1, keepdims=True)
    s_min = jnp.min(scores, axis=-1, keepdims=True)
    norm = (scores - s_min) / (s_max - s_min)

    o_ref[...] = (norm > thresh).astype(o_ref.dtype)


# ---------------------------------------------------------------------------
# Wrappers
# ---------------------------------------------------------------------------
def _row_block(total_rows, bytes_per_row, vmem_budget=4 << 20):
    """Largest row block that keeps a double-buffered tile well inside scoped
    VMEM (budget conservative enough for v5e's 16 MiB default and v7x's 64 MiB
    physical VMEM). Returns either the full extent or a multiple of 8."""
    if total_rows * bytes_per_row <= vmem_budget:
        return total_rows
    blk = max(8, (vmem_budget // max(bytes_per_row, 1)) // 8 * 8)
    return min(blk, total_rows)


def maxmin_generator(features, prototype, thresh=THRESH):
    """Pallas implementation of MaxminGenerator.forward."""
    k, d = prototype.shape
    inv_d = 1.0 / float(features.shape[-1])

    if features.ndim == 2:
        n, _ = features.shape
        tn = _row_block(n, d * 4)
        return pl.pallas_call(
            functools.partial(_maxmin_2d_kernel, inv_d=inv_d, thresh=thresh),
            out_shape=jax.ShapeDtypeStruct((n, k), jnp.float32),
            grid_spec=pltpu.PrefetchScalarGridSpec(
                num_scalar_prefetch=0,
                grid=(pl.cdiv(n, tn),),
                in_specs=[
                    pl.BlockSpec((tn, d), lambda i: (i, 0)),
                    pl.BlockSpec((k, d), lambda i: (0, 0)),
                ],
                out_specs=pl.BlockSpec((tn, k), lambda i: (i, 0)),
            ),
            compiler_params=pltpu.CompilerParams(
                dimension_semantics=("parallel",)
            ),
        )(features, prototype)

    b, m, _ = features.shape
    bb = _row_block(b, m * d * 4)
    return pl.pallas_call(
        functools.partial(_maxmin_3d_kernel, inv_d=inv_d, thresh=thresh),
        out_shape=jax.ShapeDtypeStruct((b, k), jnp.float32),
        grid_spec=pltpu.PrefetchScalarGridSpec(
            num_scalar_prefetch=0,
            grid=(pl.cdiv(b, bb),),
            in_specs=[
                pl.BlockSpec((bb, m, d), lambda i: (i, 0, 0)),
                pl.BlockSpec((k, d), lambda i: (0, 0)),
            ],
            out_specs=pl.BlockSpec((bb, k), lambda i: (i, 0)),
        ),
        compiler_params=pltpu.CompilerParams(
            dimension_semantics=("parallel",)
        ),
    )(features, prototype)


def _reference(features, prototype, thresh=THRESH):
    """Pure-JAX reference mirroring the PyTorch module."""
    d = features.shape[-1]
    if features.ndim == 2:
        scores = features @ prototype.T / d
    else:
        scores = jnp.einsum("bmd,kd->bmk", features, prototype) / d
        w = jax.nn.softmax(scores, axis=1)
        scores = jnp.einsum("bmk,bmk->bk", scores, w)
    x_max = scores.max(axis=-1, keepdims=True)
    x_min = scores.min(axis=-1, keepdims=True)
    scores = (scores - x_min) / (x_max - x_min)
    return (scores > thresh).astype(jnp.float32)


# ---------------------------------------------------------------------------
# Main
# ---------------------------------------------------------------------------
if __name__ == "__main__":
    key = jax.random.PRNGKey(0)
    k1, k2, k3 = jax.random.split(key, 3)

    # Small shapes consistent with the forward: B=2 batches, M=8 tokens,
    # D=32 feature dim, K=4 prototypes.
    B, M, D, K = 2, 8, 32, 4
    features_3d = jax.random.normal(k1, (B, M, D), dtype=jnp.float32)
    features_2d = jax.random.normal(k2, (B * M, D), dtype=jnp.float32)
    prototype = jax.random.normal(k3, (K, D), dtype=jnp.float32)

    # 3-D branch (einsum + softmax pooling) -- single grid step for B=2.
    labels_3d = maxmin_generator(features_3d, prototype)
    jax.block_until_ready(labels_3d)
    ref_3d = _reference(features_3d, prototype)
    assert labels_3d.shape == (B, K)
    assert jnp.array_equal(labels_3d, ref_3d), "3D branch mismatch"

    # 2-D branch (plain matmul).
    labels_2d = maxmin_generator(features_2d, prototype)
    jax.block_until_ready(labels_2d)
    ref_2d = _reference(features_2d, prototype)
    assert labels_2d.shape == (B * M, K)
    assert jnp.array_equal(labels_2d, ref_2d), "2D branch mismatch"

    print("KERNEL_OK")
</pallas_src>

<mosaic_0001>
module attributes {stable_mosaic.version = 11 : i64} {
  func.func @_maxmin_3d_kernel(%arg0: i32, %arg1: memref<2x8x32xf32, #tpu.memory_space<vmem>>, %arg2: memref<4x32xf32, #tpu.memory_space<vmem>>, %arg3: memref<2x4xf32, #tpu.memory_space<vmem>>) attributes {dimension_semantics = [#tpu.dimension_semantics<parallel>], iteration_bounds = array<i64: 1>, scalar_prefetch = 0 : i64, scratch_operands = 0 : i64, tpu.core_type = #tpu.core_type<tc>, window_params = [{transform_indices = @transform_0, window_bounds = array<i64: 2, 8, 32>}, {pipeline_mode = #tpu.pipeline_mode<synchronous>, transform_indices = @transform_1, window_bounds = array<i64: 4, 32>}, {transform_indices = @transform_2, window_bounds = array<i64: 2, 4>}]} {
    %c0 = arith.constant 0 : index
    %c0_0 = arith.constant 0 : index
    %c0_1 = arith.constant 0 : index
    %0 = vector.load %arg1[%c0, %c0_0, %c0_1] : memref<2x8x32xf32, #tpu.memory_space<vmem>>, vector<2x8x32xf32>
    %1 = vector.shape_cast %0 : vector<2x8x32xf32> to vector<16x32xf32>
    %c0_2 = arith.constant 0 : index
    %c0_3 = arith.constant 0 : index
    %2 = vector.load %arg2[%c0_2, %c0_3] : memref<4x32xf32, #tpu.memory_space<vmem>>, vector<4x32xf32>
    %cst = arith.constant dense<0.000000e+00> : vector<16x4xf32>
    %3 = tpu.matmul %1, %2, %cst {dimension_numbers = #tpu.dot_dimension_numbers<[1], [1], [0], [0], [0, 0, 1, 0], [], []>} : vector<16x32xf32>, vector<4x32xf32>, vector<16x4xf32> -> vector<16x4xf32>
    %cst_4 = arith.constant 3.125000e-02 : f32
    %4 = vector.broadcast %cst_4 : f32 to vector<16x4xf32>
    %5 = arith.mulf %3, %4 : vector<16x4xf32>
    %6 = vector.shape_cast %5 : vector<16x4xf32> to vector<2x8x4xf32>
    %cst_5 = arith.constant dense<0xFF800000> : vector<2x4xf32>
    %7 = vector.multi_reduction <maximumf>, %6, %cst_5 [1] : vector<2x8x4xf32> to vector<2x4xf32>
    %8 = vector.shape_cast %7 : vector<2x4xf32> to vector<2x1x4xf32>
    %9 = vector.broadcast %8 : vector<2x1x4xf32> to vector<2x8x4xf32>
    %10 = arith.subf %6, %9 : vector<2x8x4xf32>
    %11 = math.exp %10 : vector<2x8x4xf32>
    %12 = arith.mulf %6, %11 : vector<2x8x4xf32>
    %cst_6 = arith.constant dense<0.000000e+00> : vector<2x4xf32>
    %13 = vector.multi_reduction <add>, %12, %cst_6 [1] : vector<2x8x4xf32> to vector<2x4xf32>
    %cst_7 = arith.constant dense<0.000000e+00> : vector<2x4xf32>
    %14 = vector.multi_reduction <add>, %11, %cst_7 [1] : vector<2x8x4xf32> to vector<2x4xf32>
    %15 = arith.divf %13, %14 : vector<2x4xf32>
    %cst_8 = arith.constant dense<0xFF800000> : vector<2xf32>
    %16 = vector.multi_reduction <maximumf>, %15, %cst_8 [1] : vector<2x4xf32> to vector<2xf32>
    %17 = vector.shape_cast %16 : vector<2xf32> to vector<2x1xf32>
    %cst_9 = arith.constant dense<0x7F800000> : vector<2xf32>
    %18 = vector.multi_reduction <minimumf>, %15, %cst_9 [1] : vector<2x4xf32> to vector<2xf32>
    %19 = vector.shape_cast %18 : vector<2xf32> to vector<2x1xf32>
    %20 = vector.broadcast %19 : vector<2x1xf32> to vector<2x4xf32>
    %21 = arith.subf %15, %20 : vector<2x4xf32>
    %22 = arith.subf %17, %19 : vector<2x1xf32>
    %23 = vector.broadcast %22 : vector<2x1xf32> to vector<2x4xf32>
    %24 = arith.divf %21, %23 : vector<2x4xf32>
    %cst_10 = arith.constant 0.899999976 : f32
    %25 = vector.broadcast %cst_10 : f32 to vector<2x4xf32>
    %26 = arith.cmpf ogt, %24, %25 : vector<2x4xf32>
    %27 = arith.extui %26 : vector<2x4xi1> to vector<2x4xi32>
    %28 = arith.sitofp %27 : vector<2x4xi32> to vector<2x4xf32>
    %c0_11 = arith.constant 0 : index
    %c0_12 = arith.constant 0 : index
    %29 = vector.load %arg3[%c0_11, %c0_12] : memref<2x4xf32, #tpu.memory_space<vmem>>, vector<2x4xf32>
    tpu.vector_store %arg3[%c0_11, %c0_12], %28 {strides = array<i32>} : memref<2x4xf32, #tpu.memory_space<vmem>>, vector<2x4xf32>,
    return
  }
  func.func @transform_0(%arg0: i32) -> (i32, i32, i32) {
    %c0_i32 = arith.constant 0 : i32
    %c0_i32_0 = arith.constant 0 : i32
    %c0_i32_1 = arith.constant 0 : i32
    return %arg0, %c0_i32, %c0_i32_0 : i32, i32, i32
  }
  func.func @transform_1(%arg0: i32) -> (i32, i32) {
    %c0_i32 = arith.constant 0 : i32
    %c0_i32_0 = arith.constant 0 : i32
    %c0_i32_1 = arith.constant 0 : i32
    return %c0_i32, %c0_i32_0 : i32, i32
  }
  func.func @transform_2(%arg0: i32) -> (i32, i32) {
    %c0_i32 = arith.constant 0 : i32
    %c0_i32_0 = arith.constant 0 : i32
    return %arg0, %c0_i32 : i32, i32
  }
}

</mosaic_0001>

<llo_original>
// kernel: tpu_custom_call.1
$region0: #{tpu_custom_call.1}
  #allocation0 [shape = 'u32[]', space=smem, size = 0x4, offset = 0x4, fixed_abs, tag = 'smem constant byte address 0x4 - core index']
  #allocation1 [shape = 'u32[144,128]{1,0:T(1,128)}', space=vmem, size = 0x12000, scoped, tag = 'internal scratch']
  %s0 = inlined_call_operand.hbm [shape: f32[2,8,32], index: 0, kind: input, shape index: {}]
  %s1 = inlined_call_operand.hbm [shape: f32[4,32], index: 1, kind: input, shape index: {}]
  %s2 = inlined_call_operand.hbm [shape: f32[2,4], index: 2, kind: output, shape index: {}]
  %s3 = sld [smem:[#allocation0]]
  $region26: #{tpu_custom_call.1} parent=0
    _
  %s5 = ssub.s32 1, %s3
  %s6 = scalar_select 0, %s5, %s3
  $region1: #{tpu_custom_call.1} parent=0
    #allocation2 [shape = 'u8[8192]{0}', space=vmem, size = 0x2000, scoped, tag = 'input window, operand 0, single buffered']
    #allocation3 [shape = 's32[1]{0}', space=sflag, size = 0x4, scoped, tag = 'scoped memory for tpu_custom_call.1']
    #allocation4 [shape = 's32[1]{0}', space=sflag, size = 0x4, scoped, tag = 'scoped memory for tpu_custom_call.1']
    #allocation5 [shape = 'u8[2048]{0}', space=vmem, size = 0x800, scoped, tag = 'input window, operand 1, single buffered']
    #allocation6 [shape = 's32[1]{0}', space=sflag, size = 0x4, scoped, tag = 'scoped memory for tpu_custom_call.1']
    #allocation7 [shape = 'u8[1024]{0}', space=vmem, size = 0x400, scoped, tag = 'output window, operand 0, single buffered']
    %7 = vsyncpa [#allocation3], 0
    %8 = vsyncpa [#allocation6], 0
    %9 = vsyncpa [#allocation4], 0
    // Predicated region
    $region2: #{tpu_custom_call.1} parent=1 // pred_check
      _
    $region3: #{tpu_custom_call.1} parent=1 // pred_check_branch
      %11 = sbr.rel (0) target = $region5
    $region4: #{tpu_custom_call.1} parent=1 // pred_region
      %s13 = ssub.s32 256, 256
      %14 = vsyncadd [#allocation3], %s13
      %s15 = sshll.u32 [#allocation2], 4
      %s16 = int_to_ptr.vmem [resolvable:$true] %s15
      %21 = dma.hbm_to_vmem [thread:$0]  %s0, 256, %s16, [#allocation3], 128, 128, 8
    $region5: #{tpu_custom_call.1} parent=1 // pred_fallthru
      _
    // Predicated region
    $region6: #{tpu_custom_call.1} parent=1 // pred_check
      _
    $region7: #{tpu_custom_call.1} parent=1 // pred_check_branch
      %23 = sbr.rel (0) target = $region9
    $region8: #{tpu_custom_call.1} parent=1 // pred_region
      %s25 = ssub.s32 64, 64
      %26 = vsyncadd [#allocation6], %s25
      %s28 = sshll.u32 [#allocation5], 4
      %s29 = int_to_ptr.vmem [resolvable:$true] %s28
      %31 = dma.hbm_to_vmem [thread:$0]  %s1, 64, %s29, [#allocation6]
    $region9: #{tpu_custom_call.1} parent=1 // pred_fallthru
      _
    // Predicated region
    $region10: #{tpu_custom_call.1} parent=1 // pred_check
      _
    $region11: #{tpu_custom_call.1} parent=1 // pred_check_branch
      %33 = sbr.rel (0) target = $region13
    $region12: #{tpu_custom_call.1} parent=1 // pred_region
      %34 = dma.done [#allocation3], 256
    $region13: #{tpu_custom_call.1} parent=1 // pred_fallthru
      _
    // Predicated region
    $region14: #{tpu_custom_call.1} parent=1 // pred_check
      _
    $region15: #{tpu_custom_call.1} parent=1 // pred_check_branch
      %36 = sbr.rel (0) target = $region17
    $region16: #{tpu_custom_call.1} parent=1 // pred_region
      %37 = dma.done [#allocation6], 64
    $region17: #{tpu_custom_call.1} parent=1 // pred_fallthru
      _
    %v38 = vld [vmem:[#allocation2] sm:$0xff]
    %v39 = vld [vmem:[#allocation2 + $0x8] sm:$0xff]
    %v40 = vld [vmem:[#allocation5] sm:$0xf]
    %vm41 = vcmask 261120
    %v43 = vsel %vm41, %v38, 0
    %v46 = vsel %vm41, %v39, 0
    %v49 = vsel %vm41, %v40, 0
    %51 = vmatprep.subr.mxu0 0.0
    %52 = vmatpush1.xpose.msra.mxu0 %v49
    %53 = vmatprep.subr.mxu0 0.0
    %54 = vmatpush1.xpose.msra.mxu0 0.0
    %55 = vmatprep.subr.mxu0 0.0
    %56 = vmatpush1.xpose.msra.mxu0 0.0
    %57 = vmatprep.subr.mxu0 0.0
    %58 = vmatpush1.xpose.msra.mxu0 0.0
    %59 = vmatprep.subr.mxu0 0.0
    %60 = vmatpush1.xpose.msra.mxu0 0.0
    %61 = vmatprep.subr.mxu0 0.0
    %62 = vmatpush1.xpose.msra.mxu0 0.0
    %63 = vmatprep.subr.mxu0 0.0
    %64 = vmatpush1.xpose.msra.mxu0 0.0
    %65 = vmatprep.subr.mxu0 0.0
    %66 = vmatpush1.xpose.msra.mxu0 0.0
    %67 = vmatprep.subr.mxu0 0.0
    %68 = vmatpush1.xpose.msra.mxu0 0.0
    %69 = vmatprep.subr.mxu0 0.0
    %70 = vmatpush1.xpose.msra.mxu0 0.0
    %71 = vmatprep.subr.mxu0 0.0
    %72 = vmatpush1.xpose.msra.mxu0 0.0
    %73 = vmatprep.subr.mxu0 0.0
    %74 = vmatpush1.xpose.msra.mxu0 0.0
    %75 = vmatprep.subr.mxu0 0.0
    %76 = vmatpush1.xpose.msra.mxu0 0.0
    %77 = vmatprep.subr.mxu0 0.0
    %78 = vmatpush1.xpose.msra.mxu0 0.0
    %79 = vmatprep.subr.mxu0 0.0
    %80 = vmatpush1.xpose.msra.mxu0 0.0
    %81 = vmatprep.subr.mxu0 0.0
    %82 = vmatpush1.xpose.msra.mxu0 0.0
    %83 = vmatprep.subr.mxu0 0.0
    %84 = vmatpush1.xpose.msra.mxu0 0.0
    %85 = vmatprep.subr.mxu0 0.0
    %86 = vmatpush1.xpose.msra.mxu0 0.0
    %87 = vmatprep.subr.mxu0 0.0
    %88 = vmatpush1.xpose.msra.mxu0 0.0
    %89 = vmatprep.subr.mxu0 0.0
    %90 = vmatpush1.xpose.msra.mxu0 0.0
    %91 = vmatprep.subr.mxu0 0.0
    %92 = vmatpush1.xpose.msra.mxu0 0.0
    %93 = vmatprep.subr.mxu0 0.0
    %94 = vmatpush1.xpose.msra.mxu0 0.0
    %95 = vmatprep.subr.mxu0 0.0
    %96 = vmatpush1.xpose.msra.mxu0 0.0
    %97 = vmatprep.subr.mxu0 0.0
    %98 = vmatpush1.xpose.msra.mxu0 0.0
    %99 = vmatprep.subr.mxu0 0.0
    %100 = vmatpush1.xpose.msra.mxu0 0.0
    %101 = vmatprep.subr.mxu0 0.0
    %102 = vmatpush1.xpose.msra.mxu0 0.0
    %103 = vmatprep.subr.mxu0 0.0
    %104 = vmatpush1.xpose.msra.mxu0 0.0
    %105 = vmatprep.subr.mxu0 0.0
    %106 = vmatpush1.xpose.msra.mxu0 0.0
    %107 = vmatprep.subr.mxu0 0.0
    %108 = vmatpush1.xpose.msra.mxu0 0.0
    %109 = vmatprep.subr.mxu0 0.0
    %110 = vmatpush1.xpose.msra.mxu0 0.0
    %111 = vmatprep.subr.mxu0 0.0
    %112 = vmatpush1.xpose.msra.mxu0 0.0
    %113 = vmatprep.subr.mxu0 0.0
    %114 = vmatpush1.xpose.msra.mxu0 0.0
    %115 = vmatprep.mubr.f32.mxu0 0.0
    %116 = vmatmul.mubr.f32.gmra.mrb[0].mxu0 %v43
    %v117 = vpop.f32.mrb[0].mxu0
    %v118 = vadd.f32 0.0, %v117
    %v119 = vpop.f32.mrb[0].mxu0
    %120 = vmatprep.mubr.f32.mxu0 0.0
    %121 = vmatmul.mubr.f32.gmra.mrb[0].mxu0 %v46
    %v122 = vpop.f32.mrb[0].mxu0
    %v123 = vadd.f32 0.0, %v122
    %v124 = vpop.f32.mrb[0].mxu0
    %125 = vdwg.mxu0
    %v126 = vmul.f32 %v118, 0.03125
    %v127 = vmul.f32 %v123, 0.03125
    %vm128 = vcmask 31744
    %v129 = vsel %vm128, %v126, -inf
    %v130 = vrot.slane %v129, 4
    %v131 = vmax.f32 %v129, %v130
    %v132 = vrot.slane %v131, 2
    %v133 = vmax.f32 %v131, %v132
    %v134 = vrot.slane %v133, 1
    %v135 = vmax.f32 %v133, %v134
    %v136 = vsel %vm128, %v127, -inf
    %v137 = vrot.slane %v136, 4
    %v138 = vmax.f32 %v136, %v137
    %v139 = vrot.slane %v138, 2
    %v140 = vmax.f32 %v138, %v139
    %v141 = vrot.slane %v140, 1
    %v142 = vmax.f32 %v140, %v141
    %v143 = vsub.f32 %v126, %v135
    %v144 = vsub.f32 %v127, %v142
    %v145 = vmul.f32 %v143, 1.442695
    %v146 = vpow.pop %v145
    %v147 = vmul.f32 %v144, 1.442695
    %v148 = vpow.pop %v147
    %v149 = vmul.f32 %v126, %v146
    %v150 = vmul.f32 %v127, %v148
    %v151 = vsel %vm128, %v149, 0.0
    %v152 = vrot.slane %v151, 4
    %v153 = vadd.f32 %v151, %v152
    %v154 = vrot.slane %v153, 2
    %v155 = vadd.f32 %v153, %v154
    %v156 = vrot.slane %v155, 1
    %v157 = vadd.f32 %v155, %v156
    %v158 = vsel %vm128, %v150, 0.0
    %v159 = vrot.slane %v158, 4
    %v160 = vadd.f32 %v158, %v159
    %v161 = vrot.slane %v160, 2
    %v162 = vadd.f32 %v160, %v161
    %v163 = vrot.slane %v162, 1
    %v164 = vadd.f32 %v162, %v163
    %v165 = vsel %vm128, %v146, 0.0
    %v166 = vrot.slane %v165, 4
    %v167 = vadd.f32 %v165, %v166
    %v168 = vrot.slane %v167, 2
    %v169 = vadd.f32 %v167, %v168
    %v170 = vrot.slane %v169, 1
    %v171 = vadd.f32 %v169, %v170
    %v172 = vsel %vm128, %v148, 0.0
    %v173 = vrot.slane %v172, 4
    %v174 = vadd.f32 %v172, %v173
    %v175 = vrot.slane %v174, 2
    %v176 = vadd.f32 %v174, %v175
    %v177 = vrot.slane %v176, 1
    %v178 = vadd.f32 %v176, %v177
    %v179 = vrcp.pop %v171
    %v180 = vmul.f32 %v157, %v179
    %v181 = vrcp.pop %v178
    %v182 = vmul.f32 %v164, %v181
    %vm185 = vcmask 1041409
    %v186 = vsel %vm185, %v182, %v180
    %vm188 = vcmask 25600
    %v189 = vsel %vm188, %v186, -inf
    %190 = vmax.xlane.f32.xlu0 %v189
    %v191 = vpop.xlane.xlu0 %190
    %v192 = vsel %vm188, %v186, inf
    %193 = vmin.xlane.f32.xlu0 %v192
    %v194 = vpop.xlane.xlu0 %193
    %v196 = vrot.slane %v194, 1
    %v199 = vsub.f32 %v180, %v194
    %v200 = vsub.f32 %v182, %v196
    %v201 = vsub.f32 %v191, %v194
    %v203 = vrot.slane %v201, 1
    %v206 = vrcp.pop %v201
    %v207 = vmul.f32 %v199, %v206
    %v208 = vrcp.pop %v203
    %v209 = vmul.f32 %v200, %v208
    %vm210 = vcmp.gt.f32.partialorder %v207, 0.9
    %vm211 = vcmp.gt.f32.partialorder %v209, 0.9
    %v212 = vsel %vm210, 1, 0
    %v213 = vsel %vm211, 1, 0
    %v214 = vcvt.s32.f32 %v212
    %v215 = vcvt.s32.f32 %v213
    %v218 = vrot.slane %v215, 7
    %v219 = vsel %vm185, %v218, %v214
    %221 = vst.msk [vmem:[#allocation7] sm:$0x3] %vm188, %v219
    // Predicated region
    $region18: #{tpu_custom_call.1} parent=1 // pred_check
      _
    $region19: #{tpu_custom_call.1} parent=1 // pred_check_branch
      %223 = sbr.rel (0) target = $region21
    $region20: #{tpu_custom_call.1} parent=1 // pred_region
      %s225 = ssub.s32 32, 32
      %226 = vsyncadd [#allocation4], %s225
      %s228 = sshll.u32 [#allocation7], 4
      %s229 = int_to_ptr.vmem [resolvable:$true] %s228
      %231 = dma.vmem_to_hbm [thread:$0]  %s229, 32, %s2, [#allocation4]
    $region21: #{tpu_custom_call.1} parent=1 // pred_fallthru
      _
    // Predicated region
    $region22: #{tpu_custom_call.1} parent=1 // pred_check
      _
    $region23: #{tpu_custom_call.1} parent=1 // pred_check_branch
      %233 = sbr.rel (0) target = $region25
    $region24: #{tpu_custom_call.1} parent=1 // pred_region
      %234 = dma.done [#allocation4], 32
    $region25: #{tpu_custom_call.1} parent=1 // pred_fallthru
      _
    %235 = vsyncpa [#allocation3], 1
    %236 = vsyncpa [#allocation6], 1
    %237 = vsyncpa [#allocation4], 1

</llo_original>
